<compile_context>
chip_gen: v5e
topology: v5e:2x2
jax: 0.10.0
libtpu: 0.0.40
codegen_flags: <defaults>
</compile_context>

<pallas_src>
import math

import jax
import jax.numpy as jnp
from jax.experimental import pallas as pl
from jax.experimental.pallas import tpu as pltpu


# ----------------------------------------------------------------------------
# Kernels
# ----------------------------------------------------------------------------
def _matmul_kernel(x_ref, w_ref, o_ref):
    # x_ref: (TM, Kp)  w_ref: (Kp, Np)  o_ref: (TM, Np)
    o_ref[...] = jnp.dot(
        x_ref[...], w_ref[...], preferred_element_type=jnp.float32
    ).astype(o_ref.dtype)


def _matmul_kernel_bf16(x_ref, w_ref, o_ref):
    # v5e f32 + big kron: keep MXU operands in bf16 (f32 accumulate).
    o_ref[...] = jnp.dot(
        x_ref[...].astype(jnp.bfloat16),
        w_ref[...].astype(jnp.bfloat16),
        preferred_element_type=jnp.float32,
    ).astype(o_ref.dtype)


def _probe_kernel(x_ref, o_ref):
    o_ref[...] = x_ref[...]


# ----------------------------------------------------------------------------
# Runtime capability probes
# ----------------------------------------------------------------------------
_SINGLE_BUFFER_OK = None


def _single_buffer_weight_supported():
    """Probe once whether pipeline_mode=pl.Buffered(1) lowers on this runtime."""
    global _SINGLE_BUFFER_OK
    if _SINGLE_BUFFER_OK is None:
        try:
            spec = pl.BlockSpec((8, 128), lambda i: (0, 0),
                                pipeline_mode=pl.Buffered(1))
            out = pl.pallas_call(
                _probe_kernel,
                out_shape=jax.ShapeDtypeStruct((16, 128), jnp.float32),
                grid=(2,),
                in_specs=[spec],
                out_specs=pl.BlockSpec((8, 128), lambda i: (i, 0)),
            )(jnp.ones((8, 128), jnp.float32))
            jax.block_until_ready(out)
            _SINGLE_BUFFER_OK = bool(jnp.all(out == 1.0))
        except Exception:
            _SINGLE_BUFFER_OK = False
    return _SINGLE_BUFFER_OK


def _chip_profile():
    """(vmem_ceiling_bytes, is_v7, is_v5e) from the local device kind."""
    try:
        kind = jax.devices()[0].device_kind.lower()
    except Exception:
        kind = ""
    is_v7 = "v7" in kind
    is_v5e = ("v5e" in kind) or ("v5 lite" in kind) or ("v5lite" in kind)
    # v5e/v6e: 128 MiB physical -> plan against ~64 MiB.
    # v7x: 64 MiB physical -> cap the plan at ~48 MiB (headroom for Mosaic scratch).
    ceiling = (48 if is_v7 else 64) * 1024 * 1024
    return ceiling, is_v7, is_v5e


# ----------------------------------------------------------------------------
# Module
# ----------------------------------------------------------------------------
class PointEmbedding:
    """Pallas TPU port of PointEmbedding: forward(x) = x @ W^T (no bias)."""

    def __init__(self, w_t, *, out_dtype=None, block_rows=4096):
        # w_t = W^T with shape (n_vars, d_model).
        self.w_t = w_t
        self.n_vars, self.d_model = w_t.shape
        self.out_dtype = out_dtype          # None -> same as input dtype
        self.block_rows = block_rows        # 2048-4096 amortizes per-step overhead
        self._w_big = {}                    # g -> cached kron(I_g, w_t)
        self._fns = {}                      # plan key -> (g, jitted forward)

    # -- weight expansion (hoisted out of the hot path, cached per g) --------
    def _get_w_big(self, g):
        if g not in self._w_big:
            if g == 1:
                self._w_big[g] = self.w_t
            else:
                # Block-diagonal weight: packed-row matmul x_packed @ kron(I_g, w_t)
                # is exactly g independent (row @ w_t) products.
                self._w_big[g] = jnp.kron(
                    jnp.eye(g, dtype=self.w_t.dtype), self.w_t)
        return self._w_big[g]

    # -- packing factor with guards (review: unguarded kron was the gap) -----
    def _choose_g(self, m, w_bytes_per_elem, ceiling):
        n_vars, d_model = self.n_vars, self.d_model
        if d_model % 128 == 0:
            return 1                        # output already lane-dense; kron buys nothing
        if n_vars > 128 or 128 % n_vars != 0:
            return 1
        g = 128 // n_vars
        while g > 1:
            kp, np_ = g * n_vars, g * d_model
            w_vmem = kp * np_ * w_bytes_per_elem
            if (m % g == 0                   # no pad/slice full-array copies
                    and np_ % 128 == 0       # unmasked, lane-dense output stores
                    and w_vmem <= ceiling // 8):  # weight stays a small VMEM resident
                return g
            g //= 2
        return 1

    # -- build a shape-specialized, jitted forward ----------------------------
    def _build(self, batch, seq, in_dtype, out_dtype):
        n_vars, d_model = self.n_vars, self.d_model
        m = batch * seq
        in_isz = jnp.dtype(in_dtype).itemsize
        w_isz = jnp.dtype(self.w_t.dtype).itemsize
        out_isz = jnp.dtype(out_dtype).itemsize

        ceiling, is_v7, is_v5e = _chip_profile()
        single_buf = _single_buffer_weight_supported()
        w_bufs = 1 if single_buf else 2

        g = self._choose_g(m, w_isz * w_bufs, ceiling)
        kp, np_, mp = g * n_vars, g * d_model, m // g

        # Sublane alignment from the narrowest dtype on the row axis
        # (f32 -> 8, bf16 -> 16, int8 -> 32).
        align = max(32 // min(in_isz, out_isz), 8)

        # VMEM plan derived from the actual tile footprint (review item 1).
        headroom = 4 * 1024 * 1024
        w_vmem = w_bufs * kp * np_ * w_isz
        bytes_per_row = 2 * (kp * in_isz + np_ * out_isz)   # double-buffered in+out rows
        rows_fit = max(align, (ceiling - w_vmem - headroom) // bytes_per_row)
        tm = min(self.block_rows, mp, rows_fit)
        if tm < mp:
            tm = max(align, (tm // align) * align)
        # v7x: make sure both TensorCores get at least one block of rows.
        if is_v7 and pl.cdiv(mp, tm) < 2 and mp > align:
            half = ((pl.cdiv(mp, 2) + align - 1) // align) * align
            tm = min(tm, max(align, half))
        grid = (pl.cdiv(mp, tm),)

        vmem_limit = int(min(
            ceiling,
            max(16 * 1024 * 1024, tm * bytes_per_row + w_vmem + headroom)))

        # Megacore: only core_parallel changes codegen; use it on 2-TC v7x.
        if is_v7:
            sem = (getattr(pltpu, "CORE_PARALLEL", "parallel"),)
        else:
            sem = ("parallel",)

        # Cost estimate for the kernel's ACTUAL work (g-inflated matmul + packed I/O).
        cost = pl.CostEstimate(
            flops=2 * mp * kp * np_,
            transcendentals=0,
            bytes_accessed=mp * kp * in_isz + kp * np_ * w_isz + mp * np_ * out_isz,
        )

        use_bf16_mxu = (is_v5e and g > 1 and np_ >= 2048
                        and jnp.dtype(in_dtype) == jnp.dtype(jnp.float32))
        kernel = _matmul_kernel_bf16 if use_bf16_mxu else _matmul_kernel

        if single_buf:
            # Constant index_map -> multi-buffering the weight buys nothing; reclaim VMEM.
            w_spec = pl.BlockSpec((kp, np_), lambda i: (0, 0),
                                  pipeline_mode=pl.Buffered(1))
        else:
            w_spec = pl.BlockSpec((kp, np_), lambda i: (0, 0))

        call = pl.pallas_call(
            kernel,
            out_shape=jax.ShapeDtypeStruct((mp, np_), out_dtype),
            grid_spec=pltpu.PrefetchScalarGridSpec(
                num_scalar_prefetch=0,
                grid=grid,
                in_specs=[
                    pl.BlockSpec((tm, kp), lambda i: (i, 0)),
                    w_spec,                                  # VMEM-resident weight
                ],
                out_specs=pl.BlockSpec((tm, np_), lambda i: (i, 0)),
            ),
            compiler_params=pltpu.CompilerParams(
                dimension_semantics=sem,
                vmem_limit_bytes=vmem_limit,
            ),
            cost_estimate=cost,
        )

        def fwd(x, w_big):
            # Free, contiguous row-major views — no pad, no post-slice.
            x_packed = x.reshape(mp, kp)
            out_packed = call(x_packed, w_big)
            return out_packed.reshape(batch, seq, d_model)

        return g, jax.jit(fwd)

    def __call__(self, x):
        batch, seq, n_vars = x.shape
        assert n_vars == self.n_vars, "last dim of x must equal n_vars"
        out_dtype = jnp.dtype(self.out_dtype) if self.out_dtype is not None \
            else jnp.dtype(x.dtype)
        key = (batch, seq, str(jnp.dtype(x.dtype)), str(out_dtype))
        if key not in self._fns:
            self._fns[key] = self._build(batch, seq, x.dtype, out_dtype)
        g, fn = self._fns[key]
        return fn(x, self._get_w_big(g))


def init_linear_weight(key, n_vars, d_model, dtype=jnp.float32):
    """Deterministic init mirroring nn.Linear's kaiming-uniform default.

    PyTorch weight shape is (d_model, n_vars); we return its transpose
    (n_vars, d_model) so the kernel computes x @ W^T directly.
    """
    bound = 1.0 / math.sqrt(n_vars)   # kaiming_uniform(a=sqrt(5)) on fan_in=n_vars
    w_pt = jax.random.uniform(
        key, (d_model, n_vars), dtype=dtype, minval=-bound, maxval=bound)
    return w_pt.T                     # (n_vars, d_model)


if __name__ == "__main__":
    batch, seq, n_vars, d_model = 2, 8, 4, 32

    key = jax.random.PRNGKey(0)
    kx, kw = jax.random.split(key)

    x = jax.random.normal(kx, (batch, seq, n_vars), dtype=jnp.float32)
    w_t = init_linear_weight(kw, n_vars, d_model, dtype=jnp.float32)

    emb = PointEmbedding(w_t)
    y = jax.block_until_ready(emb(x))

    # Reference check against plain JAX (same math as PyTorch x @ W^T).
    y_ref = x @ w_t
    assert y.shape == (batch, seq, d_model)
    assert jnp.allclose(y, y_ref, atol=1e-5, rtol=1e-5)

    print("KERNEL_OK")
</pallas_src>

<mosaic_0001>
module attributes {stable_mosaic.version = 11 : i64} {
  func.func @_probe_kernel(%arg0: i32, %arg1: memref<8x128xf32, #tpu.memory_space<vmem>>, %arg2: memref<8x128xf32, #tpu.memory_space<vmem>>) attributes {dimension_semantics = [#tpu.dimension_semantics<arbitrary>], iteration_bounds = array<i64: 2>, scalar_prefetch = 0 : i64, scratch_operands = 0 : i64, tpu.core_type = #tpu.core_type<tc>, window_params = [{pipeline_mode = #tpu.pipeline_mode<synchronous>, transform_indices = @transform_0, window_bounds = array<i64: 8, 128>}, {transform_indices = @transform_1, window_bounds = array<i64: 8, 128>}]} {
    %c0 = arith.constant 0 : index
    %c0_0 = arith.constant 0 : index
    %0 = vector.load %arg1[%c0, %c0_0] : memref<8x128xf32, #tpu.memory_space<vmem>>, vector<8x128xf32>
    %c0_1 = arith.constant 0 : index
    %c0_2 = arith.constant 0 : index
    %1 = vector.load %arg2[%c0_1, %c0_2] : memref<8x128xf32, #tpu.memory_space<vmem>>, vector<8x128xf32>
    tpu.vector_store %arg2[%c0_1, %c0_2], %0 {strides = array<i32>} : memref<8x128xf32, #tpu.memory_space<vmem>>, vector<8x128xf32>,
    return
  }
  func.func @transform_0(%arg0: i32) -> (i32, i32) {
    %c0_i32 = arith.constant 0 : i32
    %c0_i32_0 = arith.constant 0 : i32
    %c0_i32_1 = arith.constant 0 : i32
    return %c0_i32, %c0_i32_0 : i32, i32
  }
  func.func @transform_1(%arg0: i32) -> (i32, i32) {
    %c0_i32 = arith.constant 0 : i32
    %c0_i32_0 = arith.constant 0 : i32
    return %arg0, %c0_i32 : i32, i32
  }
}

module attributes {stable_mosaic.version = 11 : i64} {
  func.func @_matmul_kernel(%arg0: i32, %arg1: memref<1x64xf32, #tpu.memory_space<vmem>>, %arg2: memref<64x512xf32, #tpu.memory_space<vmem>>, %arg3: memref<1x512xf32, #tpu.memory_space<vmem>>) attributes {dimension_semantics = [#tpu.dimension_semantics<parallel>], iteration_bounds = array<i64: 1>, scalar_prefetch = 0 : i64, scratch_operands = 0 : i64, tpu.core_type = #tpu.core_type<tc>, window_params = [{transform_indices = @transform_0, window_bounds = array<i64: 1, 64>}, {pipeline_mode = #tpu.pipeline_mode<synchronous>, transform_indices = @transform_1, window_bounds = array<i64: 64, 512>}, {transform_indices = @transform_2, window_bounds = array<i64: 1, 512>}]} {
    %c0 = arith.constant 0 : index
    %c0_0 = arith.constant 0 : index
    %0 = vector.load %arg1[%c0, %c0_0] : memref<1x64xf32, #tpu.memory_space<vmem>>, vector<1x64xf32>
    %c0_1 = arith.constant 0 : index
    %c0_2 = arith.constant 0 : index
    %1 = vector.load %arg2[%c0_1, %c0_2] : memref<64x512xf32, #tpu.memory_space<vmem>>, vector<64x512xf32>
    %cst = arith.constant dense<0.000000e+00> : vector<1x512xf32>
    %2 = tpu.matmul %0, %1, %cst {dimension_numbers = #tpu.dot_dimension_numbers<[1], [0], [0], [1], [0, 0, 1, 1], [], []>} : vector<1x64xf32>, vector<64x512xf32>, vector<1x512xf32> -> vector<1x512xf32>
    %c0_3 = arith.constant 0 : index
    %c0_4 = arith.constant 0 : index
    %3 = vector.load %arg3[%c0_3, %c0_4] : memref<1x512xf32, #tpu.memory_space<vmem>>, vector<1x512xf32>
    tpu.vector_store %arg3[%c0_3, %c0_4], %2 {strides = array<i32>} : memref<1x512xf32, #tpu.memory_space<vmem>>, vector<1x512xf32>,
    return
  }
  func.func @transform_0(%arg0: i32) -> (i32, i32) {
    %c0_i32 = arith.constant 0 : i32
    %c0_i32_0 = arith.constant 0 : i32
    return %arg0, %c0_i32 : i32, i32
  }
  func.func @transform_1(%arg0: i32) -> (i32, i32) {
    %c0_i32 = arith.constant 0 : i32
    %c0_i32_0 = arith.constant 0 : i32
    %c0_i32_1 = arith.constant 0 : i32
    return %c0_i32, %c0_i32_0 : i32, i32
  }
  func.func @transform_2(%arg0: i32) -> (i32, i32) {
    %c0_i32 = arith.constant 0 : i32
    %c0_i32_0 = arith.constant 0 : i32
    return %arg0, %c0_i32 : i32, i32
  }
}

</mosaic_0001>

<llo_original>
// kernel: tpu_custom_call.1
$region0: #{tpu_custom_call.1}
  #allocation0 [shape = 'u32[]', space=smem, size = 0x4, offset = 0x4, fixed_abs, tag = 'smem constant byte address 0x4 - core index']
  #allocation1 [shape = 'u32[72,128]{1,0:T(1,128)}', space=vmem, size = 0x9000, scoped, tag = 'internal scratch']
  %s0 = inlined_call_operand.hbm [shape: f32[8,128], index: 0, kind: input, shape index: {}]
  %s1 = inlined_call_operand.hbm [shape: f32[16,128], index: 1, kind: output, shape index: {}]
  %s2 = sld [smem:[#allocation0]]
  $region41: #{tpu_custom_call.1} parent=0
    _
  %s4 = ssub.s32 1, %s2
  %s5 = scalar_select 0, %s4, %s2
  $region1: #{tpu_custom_call.1} parent=0
    #allocation2 [shape = 'u8[4096]{0}', space=vmem, size = 0x1000, scoped, tag = 'input window, operand 0, single buffered']
    #allocation3 [shape = 's32[2]{0}', space=sflag, size = 0x8, scoped, tag = 'scoped memory for tpu_custom_call.1']
    #allocation4 [shape = 's32[2]{0}', space=sflag, size = 0x8, scoped, tag = 'scoped memory for tpu_custom_call.1']
    #allocation5 [shape = 'u8[8192]{0}', space=vmem, size = 0x2000, scoped, tag = 'output window, operand 0']
    %6 = vsyncpa [#allocation3], 0
    %7 = vsyncpa [#allocation4], 0
    %s8 = scalar_lea.sflag [#allocation4], 1
    %9 = vsyncpa %s8, 0
    loop: start=0, step=1, limit=4
    $region2: #{tpu_custom_call.1} parent=1 // loop_pre_header
      _
    $region3: #{tpu_custom_call.1} parent=1 // loop_header
      %s11 = sphi 0, %s15
      %p12 = scmp.ge.s32.totalorder %s11, 4
      %s19 = sphi 0, %s19
      %s21 = sphi 0, %s19
      %s22 = sphi 0, %s21
      %s36 = sphi 0, %s22
      %s42 = sphi 0, %s44
      %s45 = sphi 0, %s42
      %s46 = sphi 0, %s45
      %s62 = sphi 0, %s46
    $region4: #{tpu_custom_call.1} parent=1 // loop_header_branch
      %14 = sbr.rel (%p12) target = $region8
    $region5: #{tpu_custom_call.1} parent=1 // loop_body
      %s16 = ssub.s32 %s11, 1
      %s17 = ssub.s32 %s11, 2
      %s18 = sadd.s32 %s11, 1
      %s20 = sadd.s32 %s19, 1
      %p23 = scmp.eq.s32.totalorder %s11, 1
      %p24 = scmp.ne.s32.totalorder %s19, %s21
      %p25 = scmp.eq.s32.totalorder %s11, 0
      %p26 = por %p24, %p25
      %p27 = scmp.ne.s32.totalorder %s19, %s21
      %p28 = scmp.eq.s32.totalorder %s16, 1
      %p29 = por %p27, %p28
      %p30 = scmp.ne.s32.totalorder %s21, %s22
      %p31 = scmp.eq.s32.totalorder %s16, 0
      %p32 = por %p30, %p31
      %p33 = scmp.ne.s32.totalorder %s21, %s22
      %p34 = scmp.eq.s32.totalorder %s17, 1
      %p35 = por %p33, %p34
      %p37 = scmp.ne.s32.totalorder %s22, %s36
      %p38 = scmp.eq.s32.totalorder %s17, 0
      %p39 = por %p37, %p38
      %s40 = ssub.s32 %s11, %s18
      %p41 = scmp.eq.s32.totalorder %s40, 0
      %s43 = sadd.s32 %s42, 1
      %s44 = scalar_select %p41, %s42, %s43
      %p47 = pneg %p41
      %p48 = scmp.eq.s32.totalorder %s11, 1
      %p49 = por %p47, %p48
      %p50 = scmp.ne.s32.totalorder %s42, %s45
      %p51 = scmp.eq.s32.totalorder %s11, 0
      %p52 = por %p50, %p51
      %p53 = scmp.ne.s32.totalorder %s42, %s45
      %p54 = scmp.eq.s32.totalorder %s16, 1
      %p55 = por %p53, %p54
      %p56 = scmp.ne.s32.totalorder %s45, %s46
      %p57 = scmp.eq.s32.totalorder %s16, 0
      %p58 = por %p56, %p57
      %p59 = scmp.ne.s32.totalorder %s45, %s46
      %p60 = scmp.eq.s32.totalorder %s17, 1
      %p61 = por %p59, %p60
      %p63 = scmp.ne.s32.totalorder %s46, %s62
      %p64 = scmp.eq.s32.totalorder %s17, 0
      %p65 = por %p63, %p64
      %p66 = scmp.le.s32.totalorder 1, %s11
      %p67 = scmp.lt.s32.totalorder %s11, 3
      %p68 = pnand %p66, %p67
      %p69 = pneg %p68
      // Predicated region
      $region9: #{tpu_custom_call.1} parent=5 // pred_check
        _
      $region10: #{tpu_custom_call.1} parent=5 // pred_check_branch
        %71 = sbr.rel (%p68) target = $region12
      $region11: #{tpu_custom_call.1} parent=5 // pred_region
        %s72 = ssub.s32 %s11, 1
        // Predicated region
        $region13: #{tpu_custom_call.1} parent=11 // pred_check
          %p73 = pneg %p32
        $region14: #{tpu_custom_call.1} parent=11 // pred_check_branch
          %75 = sbr.rel (%p73) target = $region16
        $region15: #{tpu_custom_call.1} parent=11 // pred_region
          %77 = vsyncadd [#allocation3], 0
          %s79 = sshll.u32 %s0, 4
          %s80 = int_to_ptr.hbm [resolvable:$true] %s79
          %s81 = sshll.u32 [#allocation2], 4
          %s82 = int_to_ptr.vmem [resolvable:$true] %s81
          %84 = dma.hbm_to_vmem [thread:$0]  %s80, 128, %s82, [#allocation3]
        $region16: #{tpu_custom_call.1} parent=11 // pred_fallthru
          _
      $region12: #{tpu_custom_call.1} parent=5 // pred_fallthru
        _
      %p85 = scmp.lt.s32.totalorder %s11, 2
      // Predicated region
      $region17: #{tpu_custom_call.1} parent=5 // pred_check
        %p86 = pneg %p85
      $region18: #{tpu_custom_call.1} parent=5 // pred_check_branch
        %88 = sbr.rel (%p86) target = $region20
      $region19: #{tpu_custom_call.1} parent=5 // pred_region
        _
      $region20: #{tpu_custom_call.1} parent=5 // pred_fallthru
        _
      %p89 = scmp.le.s32.totalorder 1, %s11
      %p90 = scmp.lt.s32.totalorder %s11, 3
      %p91 = pnand %p89, %p90
      %p92 = pneg %p91
      // Predicated region
      $region21: #{tpu_custom_call.1} parent=5 // pred_check
        _
      $region22: #{tpu_custom_call.1} parent=5 // pred_check_branch
        %94 = sbr.rel (%p91) target = $region24
      $region23: #{tpu_custom_call.1} parent=5 // pred_region
        %s95 = ssub.s32 %s11, 1
        // Predicated region
        $region25: #{tpu_custom_call.1} parent=23 // pred_check
          %p96 = pneg %p32
        $region26: #{tpu_custom_call.1} parent=23 // pred_check_branch
          %98 = sbr.rel (%p96) target = $region28
        $region27: #{tpu_custom_call.1} parent=23 // pred_region
          %100 = dma.done [#allocation3], 128
        $region28: #{tpu_custom_call.1} parent=23 // pred_fallthru
          _
        %p101 = pneg %p32
        %p102 = pneg %p29
        %p103 = pneg %p58
        %p104 = pneg %p55
        %s105 = sand.u32 %s45, 1
        %s106 = scalar_lea.sflag [#allocation4], %s105
        %s107 = sand.u32 %s45, 1
        %s108 = smul.addr %s107, 8
        %s109 = scalar_lea.vmem [#allocation5], %s108
        %v110 = vld [vmem:[#allocation2] sm:$0xff]
        %111 = vst [vmem:[%s109] sm:$0xff] %v110
        %s112 = sand.u32 %s45, 1
        %s113 = scalar_lea.sflag [#allocation4], %s112
        %s114 = sand.u32 %s45, 1
        %s115 = smul.addr %s114, 8
        %s116 = scalar_lea.vmem [#allocation5], %s115
        // Predicated region
        $region29: #{tpu_custom_call.1} parent=23 // pred_check
          %p117 = pneg %p55
        $region30: #{tpu_custom_call.1} parent=23 // pred_check_branch
          %119 = sbr.rel (%p117) target = $region32
        $region31: #{tpu_custom_call.1} parent=23 // pred_region
          %121 = vsyncadd %s113, 0
          %s122 = smul.addr %s16, 8
          %s123 = scalar_lea.hbm %s1, %s122
          %s125 = sshll.u32 %s116, 4
          %s126 = int_to_ptr.vmem [resolvable:$true] %s125
          %s127 = sshll.u32 %s123, 4
          %s128 = int_to_ptr.hbm [resolvable:$true] %s127
          %130 = dma.vmem_to_hbm [thread:$0]  %s126, 128, %s128, %s113
        $region32: #{tpu_custom_call.1} parent=23 // pred_fallthru
          _
      $region24: #{tpu_custom_call.1} parent=5 // pred_fallthru
        _
      %p131 = scmp.le.s32.totalorder 2, %s11
      // Predicated region
      $region33: #{tpu_custom_call.1} parent=5 // pred_check
        %p132 = pneg %p131
      $region34: #{tpu_custom_call.1} parent=5 // pred_check_branch
        %134 = sbr.rel (%p132) target = $region36
      $region35: #{tpu_custom_call.1} parent=5 // pred_region
        %s135 = ssub.s32 %s11, 2
        // Predicated region
        $region37: #{tpu_custom_call.1} parent=35 // pred_check
          %p136 = pneg %p61
        $region38: #{tpu_custom_call.1} parent=35 // pred_check_branch
          %138 = sbr.rel (%p136) target = $region40
        $region39: #{tpu_custom_call.1} parent=35 // pred_region
          %s139 = sand.u32 %s46, 1
          %s140 = scalar_lea.sflag [#allocation4], %s139
          %s141 = sand.u32 %s46, 1
          %s142 = smul.addr %s141, 8
          %s143 = scalar_lea.vmem [#allocation5], %s142
          %145 = dma.done %s140, 128
        $region40: #{tpu_custom_call.1} parent=35 // pred_fallthru
          _
      $region36: #{tpu_custom_call.1} parent=5 // pred_fallthru
        _
    $region6: #{tpu_custom_call.1} parent=1 // loop_footer
      %s15 = sadd.s32 1, %s11
    $region7: #{tpu_custom_call.1} parent=1 // loop_footer_branch
      %10 = sbr.rel target = $region3
    $region8: #{tpu_custom_call.1} parent=1 // loop_exit
      _
    %146 = vsyncpa [#allocation3], 1
    %s147 = scalar_lea.sflag [#allocation3], 1
    %148 = vsyncpa %s147, 1
    %149 = vsyncpa [#allocation4], 1
    %s150 = scalar_lea.sflag [#allocation4], 1
    %151 = vsyncpa %s150, 1

// kernel: fwd.1
$region0: #{fwd.1}
  #allocation0 [shape = 'u32[]', space=smem, size = 0x4, offset = 0x4, fixed_abs, tag = 'smem constant byte address 0x4 - core index']
  #allocation1 [shape = 'u32[72,128]{1,0:T(1,128)}', space=vmem, size = 0x9000, scoped, tag = 'internal scratch']
  %s0 = inlined_call_operand.vmem [shape: f32[1,64], index: 0, kind: input, shape index: {}]
  %s1 = inlined_call_operand.hbm [shape: f32[64,512], index: 1, kind: input, shape index: {}]
  %s2 = inlined_call_operand.vmem [shape: f32[1,512], index: 2, kind: output, shape index: {}]
  %s3 = sld [smem:[#allocation0]]
  $region22: #{fwd.1} parent=0
    _
  %s5 = ssub.s32 1, %s3
  %s6 = scalar_select 0, %s5, %s3
  $region1: #{fwd.1} parent=0
    #allocation2 [shape = 'u8[131072]{0}', space=vmem, size = 0x20000, scoped, tag = 'input window, operand 1, single buffered']
    #allocation3 [shape = 's32[1]{0}', space=sflag, size = 0x4, scoped, tag = 'scoped memory for fwd.1']
    %7 = vsyncpa [#allocation3], 0
    // Predicated region
    $region2: #{fwd.1} parent=1 // pred_check
      _
    $region3: #{fwd.1} parent=1 // pred_check_branch
      %9 = sbr.rel (0) target = $region5
    $region4: #{fwd.1} parent=1 // pred_region
      _
    $region5: #{fwd.1} parent=1 // pred_fallthru
      _
    // Predicated region
    $region6: #{fwd.1} parent=1 // pred_check
      _
    $region7: #{fwd.1} parent=1 // pred_check_branch
      %11 = sbr.rel (0) target = $region9
    $region8: #{fwd.1} parent=1 // pred_region
      %13 = vsyncadd [#allocation3], 0
      %s14 = sshll.u32 %s1, 4
      %s15 = int_to_ptr.hbm [resolvable:$true] %s14
      %s16 = sshll.u32 [#allocation2], 4
      %s17 = int_to_ptr.vmem [resolvable:$true] %s16
      %22 = dma.hbm_to_vmem [thread:$0]  %s15, 4096, %s17, [#allocation3], 512, 512, 32
    $region9: #{fwd.1} parent=1 // pred_fallthru
      _
    // Predicated region
    $region10: #{fwd.1} parent=1 // pred_check
      _
    $region11: #{fwd.1} parent=1 // pred_check_branch
      %24 = sbr.rel (0) target = $region13
    $region12: #{fwd.1} parent=1 // pred_region
      %26 = dma.done [#allocation3], 4096
    $region13: #{fwd.1} parent=1 // pred_fallthru
      _
    %v27 = vld [vmem:[%s0] sm:$0x1]
    %v28 = vld [vmem:[#allocation2] sm:$0xff]
    %v29 = vld [vmem:[#allocation2 + $0x8] sm:$0xff]
    %v30 = vld [vmem:[#allocation2 + $0x10] sm:$0xff]
    %v31 = vld [vmem:[#allocation2 + $0x18] sm:$0xff]
    %v32 = vld [vmem:[#allocation2 + $0x20] sm:$0xff]
    %v33 = vld [vmem:[#allocation2 + $0x28] sm:$0xff]
    %v34 = vld [vmem:[#allocation2 + $0x30] sm:$0xff]
    %v35 = vld [vmem:[#allocation2 + $0x38] sm:$0xff]
    %v36 = vld [vmem:[#allocation2 + $0x40] sm:$0xff]
    %v37 = vld [vmem:[#allocation2 + $0x48] sm:$0xff]
    %v38 = vld [vmem:[#allocation2 + $0x50] sm:$0xff]
    %v39 = vld [vmem:[#allocation2 + $0x58] sm:$0xff]
    %v40 = vld [vmem:[#allocation2 + $0x60] sm:$0xff]
    %v41 = vld [vmem:[#allocation2 + $0x68] sm:$0xff]
    %v42 = vld [vmem:[#allocation2 + $0x70] sm:$0xff]
    %v43 = vld [vmem:[#allocation2 + $0x78] sm:$0xff]
    %v44 = vld [vmem:[#allocation2 + $0x80] sm:$0xff]
    %v45 = vld [vmem:[#allocation2 + $0x88] sm:$0xff]
    %v46 = vld [vmem:[#allocation2 + $0x90] sm:$0xff]
    %v47 = vld [vmem:[#allocation2 + $0x98] sm:$0xff]
    %v48 = vld [vmem:[#allocation2 + $0xa0] sm:$0xff]
    %v49 = vld [vmem:[#allocation2 + $0xa8] sm:$0xff]
    %v50 = vld [vmem:[#allocation2 + $0xb0] sm:$0xff]
    %v51 = vld [vmem:[#allocation2 + $0xb8] sm:$0xff]
    %v52 = vld [vmem:[#allocation2 + $0xc0] sm:$0xff]
    %v53 = vld [vmem:[#allocation2 + $0xc8] sm:$0xff]
    %v54 = vld [vmem:[#allocation2 + $0xd0] sm:$0xff]
    %v55 = vld [vmem:[#allocation2 + $0xd8] sm:$0xff]
    %v56 = vld [vmem:[#allocation2 + $0xe0] sm:$0xff]
    %v57 = vld [vmem:[#allocation2 + $0xe8] sm:$0xff]
    %v58 = vld [vmem:[#allocation2 + $0xf0] sm:$0xff]
    %v59 = vld [vmem:[#allocation2 + $0xf8] sm:$0xff]
    %vm60 = vcmask 523264
    %v62 = vsel %vm60, %v27, 0
    %64 = vmatpush.msra.mxu0 0.0
    %65 = vmatpush.msra.mxu0 0.0
    %66 = vmatpush.msra.mxu0 0.0
    %67 = vmatpush.msra.mxu0 0.0
    %68 = vmatpush.msra.mxu0 0.0
    %69 = vmatpush.msra.mxu0 0.0
    %70 = vmatpush.msra.mxu0 0.0
    %71 = vmatpush.msra.mxu0 0.0
    %72 = vmatpush.msra.mxu0 %v56
    %73 = vmatpush.msra.mxu0 %v52
    %74 = vmatpush.msra.mxu0 %v48
    %75 = vmatpush.msra.mxu0 %v44
    %76 = vmatpush.msra.mxu0 %v40
    %77 = vmatpush.msra.mxu0 %v36
    %78 = vmatpush.msra.mxu0 %v32
    %79 = vmatpush.msra.mxu0 %v28
    %80 = vmatmul.f32.gmra.mxu0 %v62
    %v81 = vpop.f32.mrf.mxu0
    %v82 = vadd.f32 0.0, %v81
    %83 = vdwg.mxu0
    %84 = vmatpush.msra.mxu0 0.0
    %85 = vmatpush.msra.mxu0 0.0
    %86 = vmatpush.msra.mxu0 0.0
    %87 = vmatpush.msra.mxu0 0.0
    %88 = vmatpush.msra.mxu0 0.0
    %89 = vmatpush.msra.mxu0 0.0
    %90 = vmatpush.msra.mxu0 0.0
    %91 = vmatpush.msra.mxu0 0.0
    %92 = vmatpush.msra.mxu0 %v57
    %93 = vmatpush.msra.mxu0 %v53
    %94 = vmatpush.msra.mxu0 %v49
    %95 = vmatpush.msra.mxu0 %v45
    %96 = vmatpush.msra.mxu0 %v41
    %97 = vmatpush.msra.mxu0 %v37
    %98 = vmatpush.msra.mxu0 %v33
    %99 = vmatpush.msra.mxu0 %v29
    %100 = vmatmul.f32.gmra.mxu0 %v62
    %v101 = vpop.f32.mrf.mxu0
    %v102 = vadd.f32 0.0, %v101
    %103 = vdwg.mxu0
    %104 = vmatpush.msra.mxu0 0.0
    %105 = vmatpush.msra.mxu0 0.0
    %106 = vmatpush.msra.mxu0 0.0
    %107 = vmatpush.msra.mxu0 0.0
    %108 = vmatpush.msra.mxu0 0.0
    %109 = vmatpush.msra.mxu0 0.0
    %110 = vmatpush.msra.mxu0 0.0
    %111 = vmatpush.msra.mxu0 0.0
    %112 = vmatpush.msra.mxu0 %v58
    %113 = vmatpush.msra.mxu0 %v54
    %114 = vmatpush.msra.mxu0 %v50
    %115 = vmatpush.msra.mxu0 %v46
    %116 = vmatpush.msra.mxu0 %v42
    %117 = vmatpush.msra.mxu0 %v38
    %118 = vmatpush.msra.mxu0 %v34
    %119 = vmatpush.msra.mxu0 %v30
    %120 = vmatmul.f32.gmra.mxu0 %v62
    %v121 = vpop.f32.mrf.mxu0
    %v122 = vadd.f32 0.0, %v121
    %123 = vdwg.mxu0
    %124 = vmatpush.msra.mxu0 0.0
    %125 = vmatpush.msra.mxu0 0.0
    %126 = vmatpush.msra.mxu0 0.0
    %127 = vmatpush.msra.mxu0 0.0
    %128 = vmatpush.msra.mxu0 0.0
    %129 = vmatpush.msra.mxu0 0.0
    %130 = vmatpush.msra.mxu0 0.0
    %131 = vmatpush.msra.mxu0 0.0
    %132 = vmatpush.msra.mxu0 %v59
    %133 = vmatpush.msra.mxu0 %v55
    %134 = vmatpush.msra.mxu0 %v51
    %135 = vmatpush.msra.mxu0 %v47
    %136 = vmatpush.msra.mxu0 %v43
    %137 = vmatpush.msra.mxu0 %v39
    %138 = vmatpush.msra.mxu0 %v35
    %139 = vmatpush.msra.mxu0 %v31
    %140 = vmatmul.f32.gmra.mxu0 %v62
    %v141 = vpop.f32.mrf.mxu0
    %v142 = vadd.f32 0.0, %v141
    %143 = vdwg.mxu0
    %v148 = vrot.slane %v102, 7
    %v149 = vrot.slane %v122, 6
    %v150 = vrot.slane %v142, 5
    %vm151 = vcmask 1040384
    %v152 = vsel %vm151, %v82, %v148
    %vm153 = vcmask 1042434
    %v154 = vsel %vm153, %v149, %v150
    %vm155 = vcmask 1041408
    %v156 = vsel %vm155, %v152, %v154
    %v158 = vlaneseq
    %vm159 = vcmp.ge.s32.totalorder %v158, 0
    %vm160 = vcmp.lt.s32.totalorder %v158, 512
    %vm161 = vmand %vm159, %vm160
    %162 = vst.msk [vmem:[%s2] sm:$0xf] %vm161, %v156
    // Predicated region
    $region14: #{fwd.1} parent=1 // pred_check
      _
    $region15: #{fwd.1} parent=1 // pred_check_branch
      %164 = sbr.rel (0) target = $region17
    $region16: #{fwd.1} parent=1 // pred_region
      _
    $region17: #{fwd.1} parent=1 // pred_fallthru
      _
    // Predicated region
    $region18: #{fwd.1} parent=1 // pred_check
      _
    $region19: #{fwd.1} parent=1 // pred_check_branch
      %166 = sbr.rel (0) target = $region21
    $region20: #{fwd.1} parent=1 // pred_region
      _
    $region21: #{fwd.1} parent=1 // pred_fallthru
      _
    %167 = vsyncpa [#allocation3], 1

</llo_original>
